<compile_context>
chip_gen: v6e
topology: v6e:2x2x1
jax: 0.10.0
libtpu: 0.0.40
codegen_flags: <defaults>
</compile_context>

<pallas_src>
import functools

import numpy as np

import jax
import jax.numpy as jnp
from jax.experimental import pallas as pl
from jax.experimental.pallas import tpu as pltpu


def _custom_softmax_kernel(mask_ref, seg_ref, x_ref, o_ref):
    """Fused segmented-softmax + tanh on a lane-packed (rows, L) slab.

    mask_ref: (1, L) f32, 1.0 on "discrete" (softmax) lanes, 0.0 on tanh lanes.
    seg_ref : (L, L) f32, seg_ref[i, j] = 1.0 iff lanes i and j belong to the
              same softmax segment of the same packed row.
    """
    x = x_ref[...].astype(jnp.float32)          # upcast once (bf16-safe on v5e)
    disc = mask_ref[...] > 0.0                  # (1, L); broadcasts over rows
    neg_inf = jnp.float32(-jnp.inf)

    # Stability shift: per-row max over the discrete lanes. It is constant
    # within every softmax segment, so the result equals the per-segment-max
    # softmax up to f32 rounding (deviates only if logits within one packed row
    # span > ~87, far outside this policy head's operating range).
    c = jnp.max(jnp.where(disc, x, neg_inf), axis=-1, keepdims=True)
    e = jnp.exp(jnp.where(disc, x - c, neg_inf))        # exactly 0 on tanh lanes

    # Per-segment sums, broadcast back to every lane of the segment, via one
    # constant block-diagonal matmul on the MXU (no tiny per-section reductions,
    # no concatenate).
    denom = jnp.dot(e, seg_ref[...], preferred_element_type=jnp.float32)
    # approx=True would move this onto the EUP vrcp slot; kept exact so results
    # match the torch reference to f32 rounding.
    inv = pl.reciprocal(jnp.where(disc, denom, 1.0), approx=False)

    out = jnp.where(disc, e * inv, jnp.tanh(x))
    o_ref[...] = out.astype(o_ref.dtype)


def _lane_metadata(feature_dim, sections, pack):
    """Static per-lane mask and segment matrix for the packed (*, pack*F) layout."""
    L = pack * feature_dim
    seg_of_feat = np.full((feature_dim,), -1, dtype=np.int64)
    start = 0
    for sid, s in enumerate(sections):
        seg_of_feat[start:start + s] = sid
        start += s
    lane = np.arange(L)
    feat = lane % feature_dim
    group = lane // feature_dim            # which packed row this lane belongs to
    seg = seg_of_feat[feat]
    disc = seg >= 0
    same = ((group[:, None] == group[None, :])
            & (seg[:, None] == seg[None, :])
            & disc[:, None] & disc[None, :])
    mask = disc.astype(np.float32)[None, :]      # (1, L)
    seg_mat = same.astype(np.float32)            # (L, L)
    return jnp.asarray(mask), jnp.asarray(seg_mat)


def _round_up(a, b):
    return -(-a // b) * b


@functools.partial(jax.jit, static_argnames=("discrete_action_dim", "sections"))
def custom_softmax(x, *, discrete_action_dim, sections):
    """Pallas implementation of CustomSoftMax.forward."""
    sections = tuple(int(s) for s in sections)
    D = int(discrete_action_dim)
    orig_shape = x.shape
    F = int(orig_shape[-1])
    assert sum(sections) == D and 0 <= D <= F, "sections must sum to discrete_action_dim"

    x2d = x.reshape(-1, F)
    rows = x2d.shape[0]
    if rows == 0:
        return x

    # Lane packing: fold `pack` rows into the 128-lane axis when F divides 128.
    pack = 128 // F if (F <= 128 and 128 % F == 0) else 1
    L = pack * F
    mask, seg_mat = _lane_metadata(F, sections, pack)

    # Row tiling: ~1 MiB blocks, sublane-aligned, padded so the grid divides.
    P = -(-rows // pack)                                     # packed row count
    tile = max(8, min(2048, ((1 << 20) // (L * 4)) // 8 * 8))
    tile_p = min(tile, _round_up(P, 8))
    P_pad = _round_up(P, tile_p)
    rows_pad = P_pad * pack
    if rows_pad != rows:
        x2d = jnp.pad(x2d, ((0, rows_pad - rows), (0, 0)))
    xp = x2d.reshape(P_pad, L)                               # free row-major reshape

    n_blocks = P_pad // tile_p
    out_p = pl.pallas_call(
        _custom_softmax_kernel,
        out_shape=jax.ShapeDtypeStruct((P_pad, L), x.dtype),
        grid=(n_blocks,),
        in_specs=[
            pl.BlockSpec((1, L), lambda i: (0, 0)),          # lane mask
            pl.BlockSpec((L, L), lambda i: (0, 0)),          # segment matrix
            pl.BlockSpec((tile_p, L), lambda i: (i, 0)),     # packed input rows
        ],
        out_specs=pl.BlockSpec((tile_p, L), lambda i: (i, 0)),
        compiler_params=pltpu.CompilerParams(
            dimension_semantics=("parallel",)),
    )(mask, seg_mat, xp)

    out = out_p.reshape(rows_pad, F)[:rows]
    return out.reshape(orig_shape)


def _reference(x, discrete_action_dim, sections):
    """Pure-JAX reference mirroring the PyTorch forward."""
    pieces, start = [], 0
    for s in sections:
        pieces.append(jax.nn.softmax(x[..., start:start + s], axis=-1))
        start += s
    pieces.append(jnp.tanh(x[..., discrete_action_dim:]))
    return jnp.concatenate(pieces, axis=-1)


if __name__ == "__main__":
    # Module config matching the BipedalWalker policy head: 3 discrete heads of
    # sizes (4, 3, 2) -> discrete_action_dim = 9, plus 7 continuous dims -> 16.
    discrete_action_dim = 9
    sections = (4, 3, 2)

    key = jax.random.PRNGKey(0)
    test_shapes = [
        (8, 16),        # original toy slab
        (6, 5, 16),     # arbitrary leading dims, rows not a multiple of 8
        (2, 9001, 16),  # large enough to exercise the multi-block row grid
    ]
    for shape in test_shapes:
        key, sub = jax.random.split(key)
        x = jax.random.normal(sub, shape, dtype=jnp.float32)
        out = jax.block_until_ready(
            custom_softmax(x, discrete_action_dim=discrete_action_dim,
                           sections=sections))
        ref = _reference(x, discrete_action_dim, sections)
        assert out.shape == x.shape and out.dtype == x.dtype
        assert jnp.allclose(out, ref, atol=1e-5, rtol=1e-5), f"mismatch at {shape}"

    print("KERNEL_OK")
</pallas_src>

<mosaic_0001>
module attributes {stable_mosaic.version = 11 : i64} {
  func.func @_custom_softmax_kernel(%arg0: i32, %arg1: memref<1x128xf32, #tpu.memory_space<vmem>>, %arg2: memref<128x128xf32, #tpu.memory_space<vmem>>, %arg3: memref<8x128xf32, #tpu.memory_space<vmem>>, %arg4: memref<8x128xf32, #tpu.memory_space<vmem>>) attributes {dimension_semantics = [#tpu.dimension_semantics<parallel>], iteration_bounds = array<i64: 1>, scalar_prefetch = 0 : i64, scratch_operands = 0 : i64, tpu.core_type = #tpu.core_type<tc>, window_params = [{pipeline_mode = #tpu.pipeline_mode<synchronous>, transform_indices = @transform_0, window_bounds = array<i64: 1, 128>}, {pipeline_mode = #tpu.pipeline_mode<synchronous>, transform_indices = @transform_1, window_bounds = array<i64: 128, 128>}, {transform_indices = @transform_2, window_bounds = array<i64: 8, 128>}, {transform_indices = @transform_3, window_bounds = array<i64: 8, 128>}]} {
    %c0 = arith.constant 0 : index
    %c0_0 = arith.constant 0 : index
    %0 = vector.load %arg3[%c0, %c0_0] : memref<8x128xf32, #tpu.memory_space<vmem>>, vector<8x128xf32>
    %c0_1 = arith.constant 0 : index
    %c0_2 = arith.constant 0 : index
    %1 = vector.load %arg1[%c0_1, %c0_2] : memref<1x128xf32, #tpu.memory_space<vmem>>, vector<1x128xf32>
    %cst = arith.constant 0.000000e+00 : f32
    %2 = vector.broadcast %cst : f32 to vector<1x128xf32>
    %3 = arith.cmpf ogt, %1, %2 : vector<1x128xf32>
    %cst_3 = arith.constant 0xFF800000 : f32
    %4 = vector.shape_cast %3 : vector<1x128xi1> to vector<1x128xi1>
    %5 = vector.broadcast %4 : vector<1x128xi1> to vector<8x128xi1>
    %6 = vector.broadcast %cst_3 : f32 to vector<8x128xf32>
    %7 = arith.select %5, %0, %6 : vector<8x128xi1>, vector<8x128xf32>
    %cst_4 = arith.constant dense<0xFF800000> : vector<8xf32>
    %8 = vector.multi_reduction <maximumf>, %7, %cst_4 [1] : vector<8x128xf32> to vector<8xf32>
    %9 = vector.shape_cast %8 : vector<8xf32> to vector<8x1xf32>
    %10 = vector.broadcast %9 : vector<8x1xf32> to vector<8x128xf32>
    %11 = arith.subf %0, %10 : vector<8x128xf32>
    %cst_5 = arith.constant 0xFF800000 : f32
    %12 = vector.shape_cast %3 : vector<1x128xi1> to vector<1x128xi1>
    %13 = vector.broadcast %12 : vector<1x128xi1> to vector<8x128xi1>
    %14 = vector.broadcast %cst_5 : f32 to vector<8x128xf32>
    %15 = arith.select %13, %11, %14 : vector<8x128xi1>, vector<8x128xf32>
    %16 = math.exp %15 : vector<8x128xf32>
    %c0_6 = arith.constant 0 : index
    %c0_7 = arith.constant 0 : index
    %17 = vector.load %arg2[%c0_6, %c0_7] : memref<128x128xf32, #tpu.memory_space<vmem>>, vector<128x128xf32>
    %cst_8 = arith.constant dense<0.000000e+00> : vector<8x128xf32>
    %18 = tpu.matmul %16, %17, %cst_8 {dimension_numbers = #tpu.dot_dimension_numbers<[1], [0], [0], [1], [0, 0, 1, 1], [], []>} : vector<8x128xf32>, vector<128x128xf32>, vector<8x128xf32> -> vector<8x128xf32>
    %cst_9 = arith.constant 1.000000e+00 : f32
    %19 = vector.shape_cast %3 : vector<1x128xi1> to vector<1x128xi1>
    %20 = vector.broadcast %19 : vector<1x128xi1> to vector<8x128xi1>
    %21 = vector.broadcast %cst_9 : f32 to vector<8x128xf32>
    %22 = arith.select %20, %18, %21 : vector<8x128xi1>, vector<8x128xf32>
    %23 = tpu.reciprocal %22 : vector<8x128xf32> -> vector<8x128xf32>
    %24 = arith.mulf %16, %23 : vector<8x128xf32>
    %25 = math.tanh %0 : vector<8x128xf32>
    %26 = vector.shape_cast %3 : vector<1x128xi1> to vector<1x128xi1>
    %27 = vector.broadcast %26 : vector<1x128xi1> to vector<8x128xi1>
    %28 = arith.select %27, %24, %25 : vector<8x128xi1>, vector<8x128xf32>
    %c0_10 = arith.constant 0 : index
    %c0_11 = arith.constant 0 : index
    %29 = vector.load %arg4[%c0_10, %c0_11] : memref<8x128xf32, #tpu.memory_space<vmem>>, vector<8x128xf32>
    tpu.vector_store %arg4[%c0_10, %c0_11], %28 {strides = array<i32>} : memref<8x128xf32, #tpu.memory_space<vmem>>, vector<8x128xf32>,
    return
  }
  func.func @transform_0(%arg0: i32) -> (i32, i32) {
    %c0_i32 = arith.constant 0 : i32
    %c0_i32_0 = arith.constant 0 : i32
    %c0_i32_1 = arith.constant 0 : i32
    return %c0_i32, %c0_i32_0 : i32, i32
  }
  func.func @transform_1(%arg0: i32) -> (i32, i32) {
    %c0_i32 = arith.constant 0 : i32
    %c0_i32_0 = arith.constant 0 : i32
    %c0_i32_1 = arith.constant 0 : i32
    return %c0_i32, %c0_i32_0 : i32, i32
  }
  func.func @transform_2(%arg0: i32) -> (i32, i32) {
    %c0_i32 = arith.constant 0 : i32
    %c0_i32_0 = arith.constant 0 : i32
    return %arg0, %c0_i32 : i32, i32
  }
  func.func @transform_3(%arg0: i32) -> (i32, i32) {
    %c0_i32 = arith.constant 0 : i32
    %c0_i32_0 = arith.constant 0 : i32
    return %arg0, %c0_i32 : i32, i32
  }
}

</mosaic_0001>

<llo_original>
// kernel: custom_softmax.1
$region0: #{custom_softmax.1}
  #allocation0 [shape = 'u32[]', space=smem, size = 0x4, offset = 0x4, fixed_abs, tag = 'smem constant byte address 0x4 - core index']
  #allocation1 [shape = 'u32[144,128]{1,0:T(1,128)}', space=vmem, size = 0x12000, scoped, tag = 'internal scratch']
  %s0 = inlined_call_operand.vmem [shape: f32[1,128], index: 0, kind: input, shape index: {}]
  %s1 = inlined_call_operand.vmem [shape: f32[128,128], index: 1, kind: input, shape index: {}]
  %s2 = inlined_call_operand.vmem [shape: f32[8,128], index: 2, kind: input, shape index: {}]
  %s3 = inlined_call_operand.vmem [shape: f32[8,128], index: 3, kind: output, shape index: {}]
  %s4 = sld [smem:[#allocation0]]
  $region22: #{custom_softmax.1} parent=0
    _
  %s6 = ssub.s32 1, %s4
  %s7 = scalar_select 0, %s6, %s4
  // Predicated region
  $region2: #{custom_softmax.1} parent=0 // pred_check
    _
  $region3: #{custom_softmax.1} parent=0 // pred_check_branch
    %9 = sbr.rel (0) target = $region5
  $region4: #{custom_softmax.1} parent=0 // pred_region
    _
  $region5: #{custom_softmax.1} parent=0 // pred_fallthru
    _
  // Predicated region
  $region6: #{custom_softmax.1} parent=0 // pred_check
    _
  $region7: #{custom_softmax.1} parent=0 // pred_check_branch
    %11 = sbr.rel (0) target = $region9
  $region8: #{custom_softmax.1} parent=0 // pred_region
    _
  $region9: #{custom_softmax.1} parent=0 // pred_fallthru
    _
  // Predicated region
  $region10: #{custom_softmax.1} parent=0 // pred_check
    _
  $region11: #{custom_softmax.1} parent=0 // pred_check_branch
    %13 = sbr.rel (0) target = $region13
  $region12: #{custom_softmax.1} parent=0 // pred_region
    _
  $region13: #{custom_softmax.1} parent=0 // pred_fallthru
    _
  %v14 = vld [vmem:[%s2] sm:$0xff]
  %v15 = vld [vmem:[%s0] sm:$0x1]
  %vm16 = vcmp.gt.f32.partialorder %v15, 0.0
  %v17 = vsel %vm16, 1, 0
  %v18 = vlaneseq
  %v19 = vshrl.u32 %v18, 7
  %v20 = vsub.s32 0, %v19
  %v21 = vrot.slane %v17, %v20
  %vm22 = vcmp.eq.s32.totalorder %v21, 1
  %v23 = vsel %vm22, %v14, -inf
  %24 = vmax.xlane.f32.xlu0 %v23
  %v25 = vpop.xlane.xlu0 %24
  %v26 = vsub.f32 %v14, %v25
  %v27 = vsel %vm22, %v26, -inf
  %v28 = vmul.f32 %v27, 1.442695
  %v29 = vpow.pop %v28
  %v30 = vld [vmem:[%s1] sm:$0xff]
  %v31 = vld [vmem:[%s1 + $0x8] sm:$0xff]
  %v32 = vld [vmem:[%s1 + $0x10] sm:$0xff]
  %v33 = vld [vmem:[%s1 + $0x18] sm:$0xff]
  %v34 = vld [vmem:[%s1 + $0x20] sm:$0xff]
  %v35 = vld [vmem:[%s1 + $0x28] sm:$0xff]
  %v36 = vld [vmem:[%s1 + $0x30] sm:$0xff]
  %v37 = vld [vmem:[%s1 + $0x38] sm:$0xff]
  %v38 = vld [vmem:[%s1 + $0x40] sm:$0xff]
  %v39 = vld [vmem:[%s1 + $0x48] sm:$0xff]
  %v40 = vld [vmem:[%s1 + $0x50] sm:$0xff]
  %v41 = vld [vmem:[%s1 + $0x58] sm:$0xff]
  %v42 = vld [vmem:[%s1 + $0x60] sm:$0xff]
  %v43 = vld [vmem:[%s1 + $0x68] sm:$0xff]
  %v44 = vld [vmem:[%s1 + $0x70] sm:$0xff]
  %v45 = vld [vmem:[%s1 + $0x78] sm:$0xff]
  %46 = vmatprep.subr.mxu0 0.0
  %47 = vmatpush1.msra.mxu0 %v45
  %48 = vmatprep.subr.mxu0 0.0
  %49 = vmatpush1.msra.mxu0 %v44
  %50 = vmatprep.subr.mxu0 0.0
  %51 = vmatpush1.msra.mxu0 %v43
  %52 = vmatprep.subr.mxu0 0.0
  %53 = vmatpush1.msra.mxu0 %v42
  %54 = vmatprep.subr.mxu0 0.0
  %55 = vmatpush1.msra.mxu0 %v41
  %56 = vmatprep.subr.mxu0 0.0
  %57 = vmatpush1.msra.mxu0 %v40
  %58 = vmatprep.subr.mxu0 0.0
  %59 = vmatpush1.msra.mxu0 %v39
  %60 = vmatprep.subr.mxu0 0.0
  %61 = vmatpush1.msra.mxu0 %v38
  %62 = vmatprep.subr.mxu0 0.0
  %63 = vmatpush1.msra.mxu0 %v37
  %64 = vmatprep.subr.mxu0 0.0
  %65 = vmatpush1.msra.mxu0 %v36
  %66 = vmatprep.subr.mxu0 0.0
  %67 = vmatpush1.msra.mxu0 %v35
  %68 = vmatprep.subr.mxu0 0.0
  %69 = vmatpush1.msra.mxu0 %v34
  %70 = vmatprep.subr.mxu0 0.0
  %71 = vmatpush1.msra.mxu0 %v33
  %72 = vmatprep.subr.mxu0 0.0
  %73 = vmatpush1.msra.mxu0 %v32
  %74 = vmatprep.subr.mxu0 0.0
  %75 = vmatpush1.msra.mxu0 %v31
  %76 = vmatprep.subr.mxu0 0.0
  %77 = vmatpush1.msra.mxu0 %v30
  %78 = vmatprep.subr.mxu0 0.0
  %79 = vmatpush2.msra.mxu0 0.0
  %80 = vmatprep.subr.mxu0 0.0
  %81 = vmatpush2.msra.mxu0 0.0
  %82 = vmatprep.subr.mxu0 0.0
  %83 = vmatpush2.msra.mxu0 0.0
  %84 = vmatprep.subr.mxu0 0.0
  %85 = vmatpush2.msra.mxu0 0.0
  %86 = vmatprep.subr.mxu0 0.0
  %87 = vmatpush2.msra.mxu0 0.0
  %88 = vmatprep.subr.mxu0 0.0
  %89 = vmatpush2.msra.mxu0 0.0
  %90 = vmatprep.subr.mxu0 0.0
  %91 = vmatpush2.msra.mxu0 0.0
  %92 = vmatprep.subr.mxu0 0.0
  %93 = vmatpush2.msra.mxu0 0.0
  %94 = vmatprep.subr.mxu0 0.0
  %95 = vmatpush2.msra.mxu0 0.0
  %96 = vmatprep.subr.mxu0 0.0
  %97 = vmatpush2.msra.mxu0 0.0
  %98 = vmatprep.subr.mxu0 0.0
  %99 = vmatpush2.msra.mxu0 0.0
  %100 = vmatprep.subr.mxu0 0.0
  %101 = vmatpush2.msra.mxu0 0.0
  %102 = vmatprep.subr.mxu0 0.0
  %103 = vmatpush2.msra.mxu0 0.0
  %104 = vmatprep.subr.mxu0 0.0
  %105 = vmatpush2.msra.mxu0 0.0
  %106 = vmatprep.subr.mxu0 0.0
  %107 = vmatpush2.msra.mxu0 0.0
  %108 = vmatprep.subr.mxu0 0.0
  %109 = vmatpush2.msra.mxu0 0.0
  %110 = vmatprep.mubr.f32.mxu0 0.0
  %111 = vmatmul.mubr.f32.gmra.mxu0 %v29
  %v112 = vpop.f32.mrf.mxu0
  %v113 = vadd.f32 0.0, %v112
  %v114 = vpop.f32.mrf.mxu0
  %115 = vdwg.mxu0
  %v116 = vsel %vm22, %v113, 1.0
  %v117 = vrcp.pop %v116
  %v118 = vmul.f32 %v29, %v117
  %v119 = vtanh.pop %v14
  %v120 = vsel %vm22, %v118, %v119
  %121 = vst [vmem:[%s3] sm:$0xff] %v120
  // Predicated region
  $region14: #{custom_softmax.1} parent=0 // pred_check
    _
  $region15: #{custom_softmax.1} parent=0 // pred_check_branch
    %123 = sbr.rel (0) target = $region17
  $region16: #{custom_softmax.1} parent=0 // pred_region
    _
  $region17: #{custom_softmax.1} parent=0 // pred_fallthru
    _
  // Predicated region
  $region18: #{custom_softmax.1} parent=0 // pred_check
    _
  $region19: #{custom_softmax.1} parent=0 // pred_check_branch
    %125 = sbr.rel (0) target = $region21
  $region20: #{custom_softmax.1} parent=0 // pred_region
    _
  $region21: #{custom_softmax.1} parent=0 // pred_fallthru
    _

</llo_original>
